<compile_context>
chip_gen: v7x
topology: tpu7x:2x2x1
jax: 0.10.0
libtpu: 0.0.40
codegen_flags: <defaults>
</compile_context>

<pallas_src>
import jax
import jax.numpy as jnp
from jax.experimental import pallas as pl
from jax.experimental.pallas import tpu as pltpu


def _round_up(a: int, b: int) -> int:
    return (a + b - 1) // b * b


def _broadcast_bias_kernel(bias_ref, out_ref):
    # bias_ref: (1, n_out) VMEM ; out_ref: (tile_b, n_out) VMEM.
    # The VMEM tile is lane-padded internally, but the HBM writeback DMA
    # transfers exactly the logical (tile_b, n_out) bytes (contiguous in HBM),
    # so the kernel is at the HBM-write roofline.
    # TODO(synk): a stride-0 sublane read (bias_ref[pl.ds(0, tile_b, stride=0), :])
    # would drop the per-step broadcast_in_dim vreg fill; wall-clock neutral
    # here because the pipeline is HBM-write-DMA bound.
    out_ref[...] = jnp.broadcast_to(bias_ref[...], out_ref.shape)


def _constant_net_broadcast(batch: int, bias: jax.Array, *, max_tile_rows: int | None = None):
    """Broadcast bias (n_out,) to (batch, n_out) with a Pallas kernel."""
    n_out = bias.shape[0]
    dtype = bias.dtype
    if batch == 0:
        return jnp.zeros((0, n_out), dtype)

    itemsize = jnp.dtype(dtype).itemsize

    # VMEM cost per output row is lane-padded to a multiple of 128 regardless
    # of n_out, so budget tiles on the padded width.
    lane_row_bytes = _round_up(n_out, 128) * itemsize
    budget_per_buffer = 5 << 20                       # ~10 MiB double-buffered
    tile_cap = max(8, (budget_per_buffer // lane_row_bytes) // 8 * 8)
    if max_tile_rows is not None:                     # test / tuning override
        tile_cap = max(8, min(tile_cap, _round_up(max_tile_rows, 8)))

    if batch <= tile_cap:
        # Small-output fast path: one whole-output block (full-dim block shape
        # is exempt from the (8,128) rule), single grid step, zero padding.
        tile_b = batch
        grid_n = 1
    else:
        grid_n = pl.cdiv(batch, tile_cap)
        if grid_n % 2:
            grid_n += 1          # even tile count -> balanced split over v7x's 2 TCs
        tile_b = _round_up(pl.cdiv(batch, grid_n), 8)
        grid_n = pl.cdiv(batch, tile_b)
        # Last block may be smaller than tile_b; Pallas masks the out-of-bounds
        # rows of the final output block, so no batch padding / row slice needed.

    bias2d = bias.reshape(1, n_out)                   # plain-JAX glue (tiny)

    cost = pl.CostEstimate(
        flops=0,
        transcendentals=0,
        bytes_accessed=(batch * n_out + n_out) * itemsize,   # logical traffic
    )

    vmem_need = 2 * tile_b * lane_row_bytes + 2 * 8 * lane_row_bytes
    vmem_limit = int(min(max(vmem_need + (4 << 20), 8 << 20), 32 << 20))

    return pl.pallas_call(
        _broadcast_bias_kernel,
        out_shape=jax.ShapeDtypeStruct((batch, n_out), dtype),
        grid=(grid_n,),
        in_specs=[
            # Single (1, n_out) bias block, same block index every step
            # (fetched once; re-fetch is skipped by the pipeline).
            pl.BlockSpec((1, n_out), lambda i: (0, 0)),
        ],
        out_specs=pl.BlockSpec((tile_b, n_out), lambda i: (i, 0)),
        compiler_params=pltpu.CompilerParams(
            dimension_semantics=("parallel",),
            vmem_limit_bytes=vmem_limit,
        ),
        cost_estimate=cost,
    )(bias2d)


def constant_net_forward(x, bias):
    """Pallas equivalent of constant_net.forward(x).

    x    : any array whose leading dim is the batch size (only the static
           shape is used — no data dependency on x).
    bias : (n_out,) parameter.
    returns (batch, n_out).
    """
    return _constant_net_broadcast(int(x.shape[0]), bias)


def make_constant_net_params(key, n_out=5, bias_scale=1.0):
    """Re-implementation of the PyTorch __init__:
       bias = bias_scale * (rand(n_out) * 2 - 1) * sqrt(3)
    (JAX PRNG, so parity with torch.rand is distributional only.)
    """
    u = jax.random.uniform(key, (n_out,), dtype=jnp.float32)
    return bias_scale * (u * 2.0 - 1.0) * (3.0 ** 0.5)


if __name__ == "__main__":
    key = jax.random.PRNGKey(0)
    k_bias, k_x = jax.random.split(key)

    n_out = 5
    bias = make_constant_net_params(k_bias, n_out=n_out, bias_scale=1.0)

    # Small NCHW input; only its (static) batch dim matters to forward().
    x = jax.random.normal(k_x, (2, 4, 16, 16), dtype=jnp.float32)

    out = jax.block_until_ready(constant_net_forward(x, bias))
    ref = jnp.broadcast_to(bias, (x.shape[0], n_out))
    assert out.shape == (x.shape[0], n_out)
    assert jnp.allclose(out, ref), "mismatch vs reference broadcast (small)"

    # Exercise the gridded multi-tile path (forced small tile cap -> several
    # grid steps with a clipped last block) with a larger batch as well.
    big_batch = 3000
    out_big = jax.block_until_ready(
        _constant_net_broadcast(big_batch, bias, max_tile_rows=512))
    ref_big = jnp.broadcast_to(bias, (big_batch, n_out))
    assert out_big.shape == (big_batch, n_out)
    assert jnp.allclose(out_big, ref_big), "mismatch vs reference broadcast (big)"

    print("KERNEL_OK")
</pallas_src>

<mosaic_0001>
module attributes {stable_mosaic.version = 11 : i64} {
  func.func @_broadcast_bias_kernel(%arg0: i32, %arg1: memref<1x5xf32, #tpu.memory_space<vmem>>, %arg2: memref<2x5xf32, #tpu.memory_space<vmem>>) attributes {dimension_semantics = [#tpu.dimension_semantics<parallel>], iteration_bounds = array<i64: 1>, scalar_prefetch = 0 : i64, scratch_operands = 0 : i64, tpu.core_type = #tpu.core_type<tc>, window_params = [{pipeline_mode = #tpu.pipeline_mode<synchronous>, transform_indices = @transform_0, window_bounds = array<i64: 1, 5>}, {transform_indices = @transform_1, window_bounds = array<i64: 2, 5>}]} {
    %c0 = arith.constant 0 : index
    %c0_0 = arith.constant 0 : index
    %0 = vector.load %arg1[%c0, %c0_0] : memref<1x5xf32, #tpu.memory_space<vmem>>, vector<1x5xf32>
    %1 = vector.shape_cast %0 : vector<1x5xf32> to vector<1x5xf32>
    %2 = vector.broadcast %1 : vector<1x5xf32> to vector<2x5xf32>
    %c0_1 = arith.constant 0 : index
    %c0_2 = arith.constant 0 : index
    %3 = vector.load %arg2[%c0_1, %c0_2] : memref<2x5xf32, #tpu.memory_space<vmem>>, vector<2x5xf32>
    tpu.vector_store %arg2[%c0_1, %c0_2], %2 {strides = array<i32>} : memref<2x5xf32, #tpu.memory_space<vmem>>, vector<2x5xf32>,
    return
  }
  func.func @transform_0(%arg0: i32) -> (i32, i32) {
    %c0_i32 = arith.constant 0 : i32
    %c0_i32_0 = arith.constant 0 : i32
    %c0_i32_1 = arith.constant 0 : i32
    return %c0_i32, %c0_i32_0 : i32, i32
  }
  func.func @transform_1(%arg0: i32) -> (i32, i32) {
    %c0_i32 = arith.constant 0 : i32
    %c0_i32_0 = arith.constant 0 : i32
    return %arg0, %c0_i32 : i32, i32
  }
}

</mosaic_0001>

<llo_original>
// kernel: tpu_custom_call.1
$region0: #{tpu_custom_call.1}
  #allocation0 [shape = 'u32[]', space=smem, size = 0x4, offset = 0x4, fixed_abs, tag = 'smem constant byte address 0x4 - core index']
  #allocation1 [shape = 'u32[144,128]{1,0:T(1,128)}', space=vmem, size = 0x12000, scoped, tag = 'internal scratch']
  %s0 = inlined_call_operand.hbm [shape: f32[1,5], index: 0, kind: input, shape index: {}]
  %s1 = inlined_call_operand.hbm [shape: f32[2,5], index: 1, kind: output, shape index: {}]
  %s2 = sld [smem:[#allocation0]]
  $region18: #{tpu_custom_call.1} parent=0
    _
  %s4 = ssub.s32 1, %s2
  %s5 = scalar_select 0, %s4, %s2
  $region1: #{tpu_custom_call.1} parent=0
    #allocation2 [shape = 'u8[512]{0}', space=vmem, size = 0x400, scoped, tag = 'input window, operand 0, single buffered']
    #allocation3 [shape = 's32[1]{0}', space=sflag, size = 0x4, scoped, tag = 'scoped memory for tpu_custom_call.1']
    #allocation4 [shape = 's32[1]{0}', space=sflag, size = 0x4, scoped, tag = 'scoped memory for tpu_custom_call.1']
    #allocation5 [shape = 'u8[1024]{0}', space=vmem, size = 0x400, scoped, tag = 'output window, operand 0, single buffered']
    %6 = vsyncpa [#allocation3], 0
    %7 = vsyncpa [#allocation4], 0
    // Predicated region
    $region2: #{tpu_custom_call.1} parent=1 // pred_check
      _
    $region3: #{tpu_custom_call.1} parent=1 // pred_check_branch
      %9 = sbr.rel (0) target = $region5
    $region4: #{tpu_custom_call.1} parent=1 // pred_region
      %s11 = ssub.s32 16, 16
      %12 = vsyncadd [#allocation3], %s11
      %s14 = sshll.u32 [#allocation2], 4
      %s15 = int_to_ptr.vmem [resolvable:$true] %s14
      %17 = dma.hbm_to_vmem [thread:$0]  %s0, 16, %s15, [#allocation3]
    $region5: #{tpu_custom_call.1} parent=1 // pred_fallthru
      _
    // Predicated region
    $region6: #{tpu_custom_call.1} parent=1 // pred_check
      _
    $region7: #{tpu_custom_call.1} parent=1 // pred_check_branch
      %19 = sbr.rel (0) target = $region9
    $region8: #{tpu_custom_call.1} parent=1 // pred_region
      %20 = dma.done [#allocation3], 16
    $region9: #{tpu_custom_call.1} parent=1 // pred_fallthru
      _
    %v21 = vld [vmem:[#allocation2] sm:$0x1]
    %v23 = vlaneseq
    %v24 = vshrl.u32 %v23, 7
    %v25 = vsub.s32 0, %v24
    %v26 = vrot.slane %v21, %v25
    %vm28 = vcmask 33792
    %29 = vst.msk [vmem:[#allocation5] sm:$0x3] %vm28, %v26
    // Predicated region
    $region10: #{tpu_custom_call.1} parent=1 // pred_check
      _
    $region11: #{tpu_custom_call.1} parent=1 // pred_check_branch
      %31 = sbr.rel (0) target = $region13
    $region12: #{tpu_custom_call.1} parent=1 // pred_region
      %s33 = ssub.s32 32, 32
      %34 = vsyncadd [#allocation4], %s33
      %s36 = sshll.u32 [#allocation5], 4
      %s37 = int_to_ptr.vmem [resolvable:$true] %s36
      %39 = dma.vmem_to_hbm [thread:$0]  %s37, 32, %s1, [#allocation4]
    $region13: #{tpu_custom_call.1} parent=1 // pred_fallthru
      _
    // Predicated region
    $region14: #{tpu_custom_call.1} parent=1 // pred_check
      _
    $region15: #{tpu_custom_call.1} parent=1 // pred_check_branch
      %41 = sbr.rel (0) target = $region17
    $region16: #{tpu_custom_call.1} parent=1 // pred_region
      %42 = dma.done [#allocation4], 32
    $region17: #{tpu_custom_call.1} parent=1 // pred_fallthru
      _
    %43 = vsyncpa [#allocation3], 1
    %44 = vsyncpa [#allocation4], 1

</llo_original>
